<compile_context>
chip_gen: v7x
topology: tpu7x:2x2x1
jax: 0.10.0
libtpu: 0.0.40
codegen_flags: <defaults>
</compile_context>

<pallas_src>
import jax
import jax.numpy as jnp
from jax.experimental import pallas as pl
from jax.experimental.pallas import tpu as pltpu


def _ac_head_kernel(x_ref, w1_ref, w2_ref, out_ref, acc_ref):
    """Grid = (branch, k); k tiles the 4H hidden (reduction) dimension."""
    k = pl.program_id(1)

    @pl.when(k == 0)
    def _init():
        acc_ref[...] = jnp.zeros_like(acc_ref)

    # First layer tile: [B, H] @ [H, TK] -> f32, then ReLU in f32
    # (sidesteps v5e's lack of bf16 VPU).
    h = jnp.dot(x_ref[...], w1_ref[...], preferred_element_type=jnp.float32)
    h = jnp.maximum(h, 0.0)

    # Second layer: partial sum over this TK slice of the hidden dim.
    acc_ref[...] += jnp.dot(h.astype(w2_ref.dtype), w2_ref[...],
                            preferred_element_type=jnp.float32)

    @pl.when(k == pl.num_programs(1) - 1)
    def _flush():
        out_ref[...] = acc_ref[...].astype(out_ref.dtype)


def _vmem_capacity_bytes():
    """Physical VMEM per TensorCore for the current generation (best effort)."""
    try:
        info = pltpu.get_tpu_info()
        cap = getattr(info, "vmem_capacity_bytes", None)
        if cap:
            return int(cap)
    except Exception:
        pass
    try:
        kind = jax.devices()[0].device_kind.lower()
        if "v7" in kind:
            return 64 * 1024 * 1024      # v7x: 64 MiB per TC
        return 128 * 1024 * 1024         # v5e / v6e: 128 MiB
    except Exception:
        return 64 * 1024 * 1024          # conservative fallback


def _pick_tile_k(Bp, H, H4, Ap, cdt_size, out_size, budget_bytes):
    """Largest TK in {2048,1024,512,256,128} dividing 4H whose FULL pipelined
    working set (2x W1 tile, 2x W2 tile, 2x x, f32 acc, 2x out block) fits the
    generation-aware VMEM budget."""
    def working_set(tk):
        w1 = 2 * H * tk * cdt_size          # W1 tile, double-buffered
        w2 = 2 * tk * Ap * cdt_size         # W2 tile, double-buffered
        xb = 2 * Bp * H * cdt_size          # x block, double-buffered
        acc = Bp * Ap * 4                   # f32 accumulator scratch
        ob = 2 * Bp * Ap * out_size         # output block, double-buffered
        return w1 + w2 + xb + acc + ob

    for cand in (2048, 1024, 512, 256, 128):
        if H4 % cand == 0 and working_set(cand) <= budget_bytes:
            return cand
    if H4 % 128 == 0:
        return 128
    return H4  # tiny hidden dims: single full-extent step (full-dim block is legal)


def actor_critic_head(x, w1_actor, w2_actor, w1_critic, w2_critic,
                      *, compute_dtype=jnp.bfloat16, out_dtype=jnp.float32):
    """x: [B, H]; w1_*: [H, 4H]; w2_*: [4H, A]  (PyTorch weights transposed to [in, out])."""
    B, H = x.shape
    H4 = w1_actor.shape[1]
    A = w2_actor.shape[1]
    assert w1_actor.shape == (H, H4) and w2_actor.shape == (H4, A)
    assert w1_critic.shape == (H, H4) and w2_critic.shape == (H4, A)

    cdt = compute_dtype
    cdt_size = jnp.dtype(cdt).itemsize
    out_size = jnp.dtype(out_dtype).itemsize

    # ---- lane/sublane-dense padding ----
    Ap = max(128, ((A + 127) // 128) * 128)     # lane-dense output width
    Bp = max(8, ((B + 7) // 8) * 8)             # sublane-aligned batch

    # ---- weight prep (in a real model this is done once at load time) ----
    w1 = jnp.stack([w1_actor, w1_critic], axis=0).astype(cdt)            # [2, H, 4H]
    pad = [(0, 0), (0, Ap - A)]
    w2 = jnp.stack([jnp.pad(w2_actor, pad),
                    jnp.pad(w2_critic, pad)], axis=0).astype(cdt)        # [2, 4H, Ap]
    xc = x.astype(cdt)
    if Bp != B:
        xc = jnp.pad(xc, ((0, Bp - B), (0, 0)))                          # [Bp, H]

    # ---- generation-aware VMEM budget & tile size ----
    phys_vmem = _vmem_capacity_bytes()
    vmem_limit = min(int(phys_vmem * 3 // 4), 96 * 1024 * 1024)  # ~48 MiB v7x, 96 MiB v5e/v6e
    tk = _pick_tile_k(Bp, H, H4, Ap, cdt_size, out_size,
                      budget_bytes=int(vmem_limit * 0.85))       # headroom for compiler scratch
    n_k = H4 // tk

    # ---- advisory cost model for the surrounding XLA graph ----
    cost = pl.CostEstimate(
        flops=2 * (2 * Bp * H * H4 + 2 * Bp * H4 * Ap),
        transcendentals=0,
        bytes_accessed=(2 * (H * H4 + H4 * Ap) * cdt_size
                        + Bp * H * cdt_size
                        + Bp * 2 * Ap * out_size),
    )

    out = pl.pallas_call(
        _ac_head_kernel,
        out_shape=jax.ShapeDtypeStruct((Bp, 2 * Ap), out_dtype),
        grid=(2, n_k),
        in_specs=[
            pl.BlockSpec((Bp, H), lambda b, k: (0, 0)),                      # x (grid-invariant)
            pl.BlockSpec((pl.Squeezed(), H, tk), lambda b, k: (b, 0, k)),    # W1 tile of branch b
            pl.BlockSpec((pl.Squeezed(), tk, Ap), lambda b, k: (b, k, 0)),   # W2 tile of branch b
        ],
        out_specs=pl.BlockSpec((Bp, Ap), lambda b, k: (0, b)),               # branch b's output slab
        scratch_shapes=[pltpu.VMEM((Bp, Ap), jnp.float32)],                  # f32 accumulator
        compiler_params=pltpu.CompilerParams(
            dimension_semantics=("parallel", "arbitrary"),
            vmem_limit_bytes=vmem_limit,
        ),
        cost_estimate=cost,
    )(xc, w1, w2)

    actor = out[:B, :A]
    critic = out[:B, Ap:Ap + A]
    return actor, critic


def init_params(key, hidden_dim, n_actions, dtype=jnp.float32):
    """nn.Linear-style U(-1/sqrt(fan_in), +1/sqrt(fan_in)) init, stored as [in, out]
    (transpose of PyTorch's [out, in])."""
    k1, k2, k3, k4 = jax.random.split(key, 4)
    h4 = hidden_dim * 4
    b1 = 1.0 / (hidden_dim ** 0.5)
    b2 = 1.0 / (h4 ** 0.5)
    w1a = jax.random.uniform(k1, (hidden_dim, h4), dtype, -b1, b1)
    w2a = jax.random.uniform(k2, (h4, n_actions), dtype, -b2, b2)
    w1c = jax.random.uniform(k3, (hidden_dim, h4), dtype, -b1, b1)
    w2c = jax.random.uniform(k4, (h4, n_actions), dtype, -b2, b2)
    return w1a, w2a, w1c, w2c


if __name__ == "__main__":
    batch = 8
    hidden_dim = 32
    n_actions = 8

    key = jax.random.PRNGKey(0)
    kx, kp = jax.random.split(key)
    x = jax.random.normal(kx, (batch, hidden_dim), jnp.float32)
    w1a, w2a, w1c, w2c = init_params(kp, hidden_dim, n_actions)

    actor_out, critic_out = actor_critic_head(x, w1a, w2a, w1c, w2c)
    jax.block_until_ready((actor_out, critic_out))

    # Pure-JAX reference matching the kernel's bf16 quantization of weights /
    # activations (f32 accumulation, ReLU in f32, h cast to bf16 before dot2).
    def q(a):
        return a.astype(jnp.bfloat16).astype(jnp.float32)

    with jax.default_matmul_precision("highest"):
        h_a = jnp.maximum(q(x) @ q(w1a), 0.0)
        h_c = jnp.maximum(q(x) @ q(w1c), 0.0)
        ref_a = q(h_a) @ q(w2a)
        ref_c = q(h_c) @ q(w2c)

    assert actor_out.shape == (batch, n_actions)
    assert critic_out.shape == (batch, n_actions)
    assert jnp.allclose(actor_out, ref_a, atol=2e-2, rtol=2e-2), \
        float(jnp.max(jnp.abs(actor_out - ref_a)))
    assert jnp.allclose(critic_out, ref_c, atol=2e-2, rtol=2e-2), \
        float(jnp.max(jnp.abs(critic_out - ref_c)))

    print("KERNEL_OK")
</pallas_src>

<mosaic_0001>
module attributes {stable_mosaic.version = 11 : i64} {
  func.func @_ac_head_kernel(%arg0: i32, %arg1: i32, %arg2: memref<8x32xbf16, #tpu.memory_space<vmem>>, %arg3: memref<1x32x128xbf16, #tpu.memory_space<vmem>>, %arg4: memref<1x128x128xbf16, #tpu.memory_space<vmem>>, %arg5: memref<8x128xf32, #tpu.memory_space<vmem>>, %arg6: memref<8x128xf32, #tpu.memory_space<vmem>>) attributes {dimension_semantics = [#tpu.dimension_semantics<parallel>, #tpu.dimension_semantics<arbitrary>], iteration_bounds = array<i64: 2, 1>, scalar_prefetch = 0 : i64, scratch_operands = 1 : i64, tpu.core_type = #tpu.core_type<tc>, window_params = [{pipeline_mode = #tpu.pipeline_mode<synchronous>, transform_indices = @transform_0, window_bounds = array<i64: 8, 32>}, {transform_indices = @transform_1, window_bounds = array<i64: 1, 32, 128>}, {transform_indices = @transform_2, window_bounds = array<i64: 1, 128, 128>}, {transform_indices = @transform_3, window_bounds = array<i64: 8, 128>}]} {
    %c0_i32 = arith.constant 0 : i32
    %0 = arith.cmpi eq, %arg1, %c0_i32 : i32
    %1 = arith.extui %0 : i1 to i32
    %c0_i32_0 = arith.constant 0 : i32
    %2 = arith.cmpi ne, %1, %c0_i32_0 : i32
    scf.if %2 {
      %cst_16 = arith.constant 0.000000e+00 : f32
      %19 = vector.broadcast %cst_16 : f32 to vector<8x128xf32>
      %c0_17 = arith.constant 0 : index
      %c0_18 = arith.constant 0 : index
      %20 = vector.load %arg6[%c0_17, %c0_18] : memref<8x128xf32, #tpu.memory_space<vmem>>, vector<8x128xf32>
      tpu.vector_store %arg6[%c0_17, %c0_18], %19 {strides = array<i32>} : memref<8x128xf32, #tpu.memory_space<vmem>>, vector<8x128xf32>,
    } else {
    }
    %c0 = arith.constant 0 : index
    %c0_1 = arith.constant 0 : index
    %3 = vector.load %arg2[%c0, %c0_1] : memref<8x32xbf16, #tpu.memory_space<vmem>>, vector<8x32xbf16>
    %c0_2 = arith.constant 0 : index
    %c0_3 = arith.constant 0 : index
    %c0_4 = arith.constant 0 : index
    %4 = vector.load %arg3[%c0_2, %c0_3, %c0_4] : memref<1x32x128xbf16, #tpu.memory_space<vmem>>, vector<1x32x128xbf16>
    %5 = vector.shape_cast %4 : vector<1x32x128xbf16> to vector<32x128xbf16>
    %cst = arith.constant dense<0.000000e+00> : vector<8x128xf32>
    %6 = tpu.matmul %3, %5, %cst {dimension_numbers = #tpu.dot_dimension_numbers<[1], [0], [0], [1], [0, 0, 1, 1], [], []>} : vector<8x32xbf16>, vector<32x128xbf16>, vector<8x128xf32> -> vector<8x128xf32>
    %cst_5 = arith.constant 0.000000e+00 : f32
    %7 = vector.broadcast %cst_5 : f32 to vector<8x128xf32>
    %8 = arith.maximumf %6, %7 : vector<8x128xf32>
    %c0_6 = arith.constant 0 : index
    %c0_7 = arith.constant 0 : index
    %9 = vector.load %arg6[%c0_6, %c0_7] : memref<8x128xf32, #tpu.memory_space<vmem>>, vector<8x128xf32>
    %10 = arith.truncf %8 : vector<8x128xf32> to vector<8x128xbf16>
    %c0_8 = arith.constant 0 : index
    %c0_9 = arith.constant 0 : index
    %c0_10 = arith.constant 0 : index
    %11 = vector.load %arg4[%c0_8, %c0_9, %c0_10] : memref<1x128x128xbf16, #tpu.memory_space<vmem>>, vector<1x128x128xbf16>
    %12 = vector.shape_cast %11 : vector<1x128x128xbf16> to vector<128x128xbf16>
    %cst_11 = arith.constant dense<0.000000e+00> : vector<8x128xf32>
    %13 = tpu.matmul %10, %12, %cst_11 {dimension_numbers = #tpu.dot_dimension_numbers<[1], [0], [0], [1], [0, 0, 1, 1], [], []>} : vector<8x128xbf16>, vector<128x128xbf16>, vector<8x128xf32> -> vector<8x128xf32>
    %14 = arith.addf %9, %13 : vector<8x128xf32>
    %c0_12 = arith.constant 0 : index
    %c0_13 = arith.constant 0 : index
    %15 = vector.load %arg6[%c0_12, %c0_13] : memref<8x128xf32, #tpu.memory_space<vmem>>, vector<8x128xf32>
    tpu.vector_store %arg6[%c0_12, %c0_13], %14 {strides = array<i32>} : memref<8x128xf32, #tpu.memory_space<vmem>>, vector<8x128xf32>,
    %c0_i32_14 = arith.constant 0 : i32
    %16 = arith.cmpi eq, %arg1, %c0_i32_14 : i32
    %17 = arith.extui %16 : i1 to i32
    %c0_i32_15 = arith.constant 0 : i32
    %18 = arith.cmpi ne, %17, %c0_i32_15 : i32
    scf.if %18 {
      %c0_16 = arith.constant 0 : index
      %c0_17 = arith.constant 0 : index
      %19 = vector.load %arg6[%c0_16, %c0_17] : memref<8x128xf32, #tpu.memory_space<vmem>>, vector<8x128xf32>
      %c0_18 = arith.constant 0 : index
      %c0_19 = arith.constant 0 : index
      %20 = vector.load %arg5[%c0_18, %c0_19] : memref<8x128xf32, #tpu.memory_space<vmem>>, vector<8x128xf32>
      tpu.vector_store %arg5[%c0_18, %c0_19], %19 {strides = array<i32>} : memref<8x128xf32, #tpu.memory_space<vmem>>, vector<8x128xf32>,
    } else {
    }
    return
  }
  func.func @transform_0(%arg0: i32, %arg1: i32) -> (i32, i32) {
    %c0_i32 = arith.constant 0 : i32
    %c0_i32_0 = arith.constant 0 : i32
    %c0_i32_1 = arith.constant 0 : i32
    return %c0_i32, %c0_i32_0 : i32, i32
  }
  func.func @transform_1(%arg0: i32, %arg1: i32) -> (i32, i32, i32) {
    %c0_i32 = arith.constant 0 : i32
    %c0_i32_0 = arith.constant 0 : i32
    return %arg0, %c0_i32, %arg1 : i32, i32, i32
  }
  func.func @transform_2(%arg0: i32, %arg1: i32) -> (i32, i32, i32) {
    %c0_i32 = arith.constant 0 : i32
    %c0_i32_0 = arith.constant 0 : i32
    return %arg0, %arg1, %c0_i32 : i32, i32, i32
  }
  func.func @transform_3(%arg0: i32, %arg1: i32) -> (i32, i32) {
    %c0_i32 = arith.constant 0 : i32
    %c0_i32_0 = arith.constant 0 : i32
    return %c0_i32, %arg0 : i32, i32
  }
}

</mosaic_0001>

<llo_original>
// kernel: tpu_custom_call.1
$region0: #{tpu_custom_call.1}
  #allocation0 [shape = 'u32[]', space=smem, size = 0x4, offset = 0x4, fixed_abs, tag = 'smem constant byte address 0x4 - core index']
  #allocation1 [shape = 'u32[144,128]{1,0:T(1,128)}', space=vmem, size = 0x12000, scoped, tag = 'internal scratch']
  #allocation2 [shape = 'f32[8,128]{1,0:T(8,128)}', space=vmem, size = 0x1000, scoped, tag = 'scratch operand']
  %s0 = inlined_call_operand.hbm [shape: bf16[8,32], index: 0, kind: input, shape index: {}]
  %s1 = inlined_call_operand.hbm [shape: bf16[2,32,128], index: 1, kind: input, shape index: {}]
  %s2 = inlined_call_operand.hbm [shape: bf16[2,128,128], index: 2, kind: input, shape index: {}]
  %s3 = inlined_call_operand.hbm [shape: f32[8,256], index: 3, kind: output, shape index: {}]
  %s4 = sld [smem:[#allocation0]]
  $region65: #{tpu_custom_call.1} parent=0
    _
  %s6 = ssub.s32 1, %s4
  %s7 = scalar_select 0, %s6, %s4
  $region1: #{tpu_custom_call.1} parent=0
    #allocation3 [shape = 'u8[2048]{0}', space=vmem, size = 0x800, scoped, tag = 'input window, operand 0, single buffered']
    #allocation4 [shape = 's32[2]{0}', space=sflag, size = 0x8, scoped, tag = 'scoped memory for tpu_custom_call.1']
    #allocation5 [shape = 's32[2]{0}', space=sflag, size = 0x8, scoped, tag = 'scoped memory for tpu_custom_call.1']
    #allocation6 [shape = 'u8[16384]{0}', space=vmem, size = 0x4000, scoped, tag = 'input window, operand 1']
    #allocation7 [shape = 's32[2]{0}', space=sflag, size = 0x8, scoped, tag = 'scoped memory for tpu_custom_call.1']
    #allocation8 [shape = 'u8[65536]{0}', space=vmem, size = 0x10000, scoped, tag = 'input window, operand 2']
    #allocation9 [shape = 'u8[8192]{0}', space=vmem, size = 0x2000, scoped, tag = 'output window, operand 0']
    %8 = vsyncpa [#allocation4], 0
    %9 = vsyncpa [#allocation7], 0
    %s10 = scalar_lea.sflag [#allocation7], 1
    %11 = vsyncpa %s10, 0
    %12 = vsyncpa [#allocation5], 0
    %s13 = scalar_lea.sflag [#allocation5], 1
    %14 = vsyncpa %s13, 0
    loop: start=0, step=1, limit=4
    $region2: #{tpu_custom_call.1} parent=1 // loop_pre_header
      _
    $region3: #{tpu_custom_call.1} parent=1 // loop_header
      %s16 = sphi 0, %s20
      %p17 = scmp.ge.s32.totalorder %s16, 4
      %s23 = sphi 0, %s35
      %s24 = sphi 0, %s31
      %s25 = sphi 0, %s23
      %s26 = sphi 0, %s24
      %s27 = sphi 0, %s25
      %s28 = sphi 0, %s26
      %s36 = sphi 0, %s36
      %s38 = sphi 0, %s36
      %s39 = sphi 0, %s38
      %s53 = sphi 0, %s39
      %s61 = sphi 0, %s63
      %s64 = sphi 0, %s61
      %s65 = sphi 0, %s64
      %s81 = sphi 0, %s65
      %s89 = sphi 0, %s91
      %s92 = sphi 0, %s89
      %s93 = sphi 0, %s92
      %s109 = sphi 0, %s93
      %s115 = sphi 0, %s117
      %s118 = sphi 0, %s115
      %s119 = sphi 0, %s118
      %s135 = sphi 0, %s119
    $region4: #{tpu_custom_call.1} parent=1 // loop_header_branch
      %19 = sbr.rel (%p17) target = $region8
    $region5: #{tpu_custom_call.1} parent=1 // loop_body
      %s21 = ssub.s32 %s16, 1
      %s22 = ssub.s32 %s16, 2
      %s29 = sadd.s32 1, %s24
      %p30 = scmp.ge.s32.totalorder %s29, 1
      %s31 = scalar_select %p30, 0, %s29
      %s32 = sadd.s32 1, %s23
      %s33 = scalar_select %p30, %s32, %s23
      %p34 = scmp.ge.s32.totalorder %s33, 2
      %s35 = scalar_select %p34, 0, %s33
      %s37 = sadd.s32 %s36, 1
      %p40 = scmp.eq.s32.totalorder %s16, 1
      %p41 = scmp.ne.s32.totalorder %s36, %s38
      %p42 = scmp.eq.s32.totalorder %s16, 0
      %p43 = por %p41, %p42
      %p44 = scmp.ne.s32.totalorder %s36, %s38
      %p45 = scmp.eq.s32.totalorder %s21, 1
      %p46 = por %p44, %p45
      %p47 = scmp.ne.s32.totalorder %s38, %s39
      %p48 = scmp.eq.s32.totalorder %s21, 0
      %p49 = por %p47, %p48
      %p50 = scmp.ne.s32.totalorder %s38, %s39
      %p51 = scmp.eq.s32.totalorder %s22, 1
      %p52 = por %p50, %p51
      %p54 = scmp.ne.s32.totalorder %s39, %s53
      %p55 = scmp.eq.s32.totalorder %s22, 0
      %p56 = por %p54, %p55
      %s57 = ssub.s32 %s23, %s35
      %s58 = ssub.s32 %s24, %s31
      %s59 = sor.u32 %s57, %s58
      %p60 = scmp.eq.s32.totalorder %s59, 0
      %s62 = sadd.s32 %s61, 1
      %s63 = scalar_select %p60, %s61, %s62
      %p66 = pneg %p60
      %p67 = scmp.eq.s32.totalorder %s16, 1
      %p68 = por %p66, %p67
      %p69 = scmp.ne.s32.totalorder %s61, %s64
      %p70 = scmp.eq.s32.totalorder %s16, 0
      %p71 = por %p69, %p70
      %p72 = scmp.ne.s32.totalorder %s61, %s64
      %p73 = scmp.eq.s32.totalorder %s21, 1
      %p74 = por %p72, %p73
      %p75 = scmp.ne.s32.totalorder %s64, %s65
      %p76 = scmp.eq.s32.totalorder %s21, 0
      %p77 = por %p75, %p76
      %p78 = scmp.ne.s32.totalorder %s64, %s65
      %p79 = scmp.eq.s32.totalorder %s22, 1
      %p80 = por %p78, %p79
      %p82 = scmp.ne.s32.totalorder %s65, %s81
      %p83 = scmp.eq.s32.totalorder %s22, 0
      %p84 = por %p82, %p83
      %s85 = ssub.s32 %s23, %s35
      %s86 = ssub.s32 %s24, %s31
      %s87 = sor.u32 %s85, %s86
      %p88 = scmp.eq.s32.totalorder %s87, 0
      %s90 = sadd.s32 %s89, 1
      %s91 = scalar_select %p88, %s89, %s90
      %p94 = pneg %p88
      %p95 = scmp.eq.s32.totalorder %s16, 1
      %p96 = por %p94, %p95
      %p97 = scmp.ne.s32.totalorder %s89, %s92
      %p98 = scmp.eq.s32.totalorder %s16, 0
      %p99 = por %p97, %p98
      %p100 = scmp.ne.s32.totalorder %s89, %s92
      %p101 = scmp.eq.s32.totalorder %s21, 1
      %p102 = por %p100, %p101
      %p103 = scmp.ne.s32.totalorder %s92, %s93
      %p104 = scmp.eq.s32.totalorder %s21, 0
      %p105 = por %p103, %p104
      %p106 = scmp.ne.s32.totalorder %s92, %s93
      %p107 = scmp.eq.s32.totalorder %s22, 1
      %p108 = por %p106, %p107
      %p110 = scmp.ne.s32.totalorder %s93, %s109
      %p111 = scmp.eq.s32.totalorder %s22, 0
      %p112 = por %p110, %p111
      %s113 = ssub.s32 %s23, %s35
      %p114 = scmp.eq.s32.totalorder %s113, 0
      %s116 = sadd.s32 %s115, 1
      %s117 = scalar_select %p114, %s115, %s116
      %p120 = pneg %p114
      %p121 = scmp.eq.s32.totalorder %s16, 1
      %p122 = por %p120, %p121
      %p123 = scmp.ne.s32.totalorder %s115, %s118
      %p124 = scmp.eq.s32.totalorder %s16, 0
      %p125 = por %p123, %p124
      %p126 = scmp.ne.s32.totalorder %s115, %s118
      %p127 = scmp.eq.s32.totalorder %s21, 1
      %p128 = por %p126, %p127
      %p129 = scmp.ne.s32.totalorder %s118, %s119
      %p130 = scmp.eq.s32.totalorder %s21, 0
      %p131 = por %p129, %p130
      %p132 = scmp.ne.s32.totalorder %s118, %s119
      %p133 = scmp.eq.s32.totalorder %s22, 1
      %p134 = por %p132, %p133
      %p136 = scmp.ne.s32.totalorder %s119, %s135
      %p137 = scmp.eq.s32.totalorder %s22, 0
      %p138 = por %p136, %p137
      %p139 = scmp.le.s32.totalorder 1, %s16
      %p140 = scmp.lt.s32.totalorder %s16, 3
      %p141 = pnand %p139, %p140
      %p142 = pneg %p141
      // Predicated region
      $region9: #{tpu_custom_call.1} parent=5 // pred_check
        _
      $region10: #{tpu_custom_call.1} parent=5 // pred_check_branch
        %144 = sbr.rel (%p141) target = $region12
      $region11: #{tpu_custom_call.1} parent=5 // pred_region
        %s145 = ssub.s32 %s16, 1
        // Predicated region
        $region13: #{tpu_custom_call.1} parent=11 // pred_check
          %p146 = pneg %p49
        $region14: #{tpu_custom_call.1} parent=11 // pred_check_branch
          %148 = sbr.rel (%p146) target = $region16
        $region15: #{tpu_custom_call.1} parent=11 // pred_region
          %s150 = ssub.s32 64, 64
          %151 = vsyncadd [#allocation4], %s150
          %s153 = sshll.u32 [#allocation3], 4
          %s154 = int_to_ptr.vmem [resolvable:$true] %s153
          %156 = dma.hbm_to_vmem [thread:$0]  %s0, 64, %s154, [#allocation4]
        $region16: #{tpu_custom_call.1} parent=11 // pred_fallthru
          _
      $region12: #{tpu_custom_call.1} parent=5 // pred_fallthru
        _
      %p157 = scmp.lt.s32.totalorder %s16, 2
      // Predicated region
      $region17: #{tpu_custom_call.1} parent=5 // pred_check
        %p158 = pneg %p157
      $region18: #{tpu_custom_call.1} parent=5 // pred_check_branch
        %160 = sbr.rel (%p158) target = $region20
      $region19: #{tpu_custom_call.1} parent=5 // pred_region
        // Predicated region
        $region21: #{tpu_custom_call.1} parent=19 // pred_check
          %p161 = pneg %p71
        $region22: #{tpu_custom_call.1} parent=19 // pred_check_branch
          %163 = sbr.rel (%p161) target = $region24
        $region23: #{tpu_custom_call.1} parent=19 // pred_region
          %s164 = sand.u32 %s16, 1
          %s165 = scalar_lea.sflag [#allocation7], %s164
          %s166 = sand.u32 %s61, 1
          %s167 = smul.addr %s166, 16
          %s168 = scalar_lea.vmem [#allocation6], %s167
          %s170 = ssub.s32 256, 256
          %171 = vsyncadd %s165, %s170
          %s172 = smul.addr %s23, 4
          %s173 = sadd.s32 %s24, %s172
          %s174 = smul.addr %s173, 64
          %s175 = scalar_lea.hbm %s1, %s174
          %s176 = sshll.u32 %s168, 4
          %s177 = int_to_ptr.vmem [resolvable:$true] %s176
          %182 = dma.hbm_to_vmem [thread:$0]  %s175, 256, %s177, %s165, 64, 64, 4
        $region24: #{tpu_custom_call.1} parent=19 // pred_fallthru
          _
        // Predicated region
        $region25: #{tpu_custom_call.1} parent=19 // pred_check
          %p183 = pneg %p99
        $region26: #{tpu_custom_call.1} parent=19 // pred_check_branch
          %185 = sbr.rel (%p183) target = $region28
        $region27: #{tpu_custom_call.1} parent=19 // pred_region
          %s186 = sand.u32 %s16, 1
          %s187 = scalar_lea.sflag [#allocation7], %s186
          %s188 = sand.u32 %s89, 1
          %s189 = smul.addr %s188, 64
          %s190 = scalar_lea.vmem [#allocation8], %s189
          %s191 = smul.u32 16, %s24
          %s193 = ssub.s32 1024, 1024
          %194 = vsyncadd %s187, %s193
          %s195 = smul.addr %s23, 16
          %s196 = sadd.s32 %s191, %s195
          %s197 = smul.addr %s196, 64
          %s198 = scalar_lea.hbm %s2, %s197
          %s199 = sshll.u32 %s190, 4
          %s200 = int_to_ptr.vmem [resolvable:$true] %s199
          %205 = dma.hbm_to_vmem [thread:$0]  %s198, 1024, %s200, %s187, 64, 64, 4
        $region28: #{tpu_custom_call.1} parent=19 // pred_fallthru
          _
      $region20: #{tpu_custom_call.1} parent=5 // pred_fallthru
        _
      %p206 = scmp.le.s32.totalorder 1, %s16
      %p207 = scmp.lt.s32.totalorder %s16, 3
      %p208 = pnand %p206, %p207
      %p209 = pneg %p208
      // Predicated region
      $region29: #{tpu_custom_call.1} parent=5 // pred_check
        _
      $region30: #{tpu_custom_call.1} parent=5 // pred_check_branch
        %211 = sbr.rel (%p208) target = $region32
      $region31: #{tpu_custom_call.1} parent=5 // pred_region
        %s212 = ssub.s32 %s16, 1
        // Predicated region
        $region33: #{tpu_custom_call.1} parent=31 // pred_check
          %p213 = pneg %p49
        $region34: #{tpu_custom_call.1} parent=31 // pred_check_branch
          %215 = sbr.rel (%p213) target = $region36
        $region35: #{tpu_custom_call.1} parent=31 // pred_region
          %216 = dma.done [#allocation4], 64
        $region36: #{tpu_custom_call.1} parent=31 // pred_fallthru
          _
        %s217 = sand.u32 %s21, 1
        %s218 = scalar_lea.sflag [#allocation7], %s217
        %s219 = sand.u32 %s64, 1
        %s220 = smul.addr %s219, 16
        %s221 = scalar_lea.vmem [#allocation6], %s220
        // Predicated region
        $region37: #{tpu_custom_call.1} parent=31 // pred_check
          %p222 = pneg %p77
        $region38: #{tpu_custom_call.1} parent=31 // pred_check_branch
          %224 = sbr.rel (%p222) target = $region40
        $region39: #{tpu_custom_call.1} parent=31 // pred_region
          %225 = dma.done %s218, 256
        $region40: #{tpu_custom_call.1} parent=31 // pred_fallthru
          _
        %s226 = sand.u32 %s21, 1
        %s227 = scalar_lea.sflag [#allocation7], %s226
        %s228 = sand.u32 %s92, 1
        %s229 = smul.addr %s228, 64
        %s230 = scalar_lea.vmem [#allocation8], %s229
        // Predicated region
        $region41: #{tpu_custom_call.1} parent=31 // pred_check
          %p231 = pneg %p105
        $region42: #{tpu_custom_call.1} parent=31 // pred_check_branch
          %233 = sbr.rel (%p231) target = $region44
        $region43: #{tpu_custom_call.1} parent=31 // pred_region
          %234 = dma.done %s227, 1024
        $region44: #{tpu_custom_call.1} parent=31 // pred_fallthru
          _
        %p235 = pneg %p49
        %p236 = pneg %p46
        %s237 = sand.u32 %s21, 1
        %s238 = scalar_lea.sflag [#allocation7], %s237
        %s239 = sand.u32 %s64, 1
        %s240 = smul.addr %s239, 16
        %s241 = scalar_lea.vmem [#allocation6], %s240
        %p242 = pneg %p77
        %p243 = pneg %p74
        %s244 = sand.u32 %s21, 1
        %s245 = scalar_lea.sflag [#allocation7], %s244
        %s246 = sand.u32 %s92, 1
        %s247 = smul.addr %s246, 64
        %s248 = scalar_lea.vmem [#allocation8], %s247
        %p249 = pneg %p105
        %p250 = pneg %p102
        %p251 = pneg %p131
        %p252 = pneg %p128
        %s253 = sand.u32 %s118, 1
        %s254 = scalar_lea.sflag [#allocation5], %s253
        %s255 = sand.u32 %s118, 1
        %s256 = smul.addr %s255, 8
        %s257 = scalar_lea.vmem [#allocation9], %s256
        %s258 = smul.u32 16, %s26
        %p260 = scmp.eq.s32.totalorder %s26, 0
        // Predicated region
        $region45: #{tpu_custom_call.1} parent=31 // pred_check
          %p261 = pneg %p260
        $region46: #{tpu_custom_call.1} parent=31 // pred_check_branch
          %263 = sbr.rel (%p261) target = $region48
        $region47: #{tpu_custom_call.1} parent=31 // pred_region
          %264 = vst [vmem:[#allocation2] sm:$0xff] 0.0
        $region48: #{tpu_custom_call.1} parent=31 // pred_fallthru
          _
        %v265 = vld [vmem:[#allocation3] sm:$0xf]
        %v266 = vld [vmem:[%s221] sm:$0xf]
        %v267 = vld [vmem:[%s221 + $0x4] sm:$0xf]
        %v268 = vld [vmem:[%s221 + $0x8] sm:$0xf]
        %v269 = vld [vmem:[%s221 + $0xc] sm:$0xf]
        %v274 = vunpack.c.l.b16 %v266
        %v275 = vunpack.c.l.b16 %v267
        %v276 = vunpack.c.l.b16 %v268
        %v277 = vunpack.c.l.b16 %v269
        %v278 = vpack.c.b16 %v275, %v274
        %v279 = vpack.c.b16 %v277, %v276
        %vm282 = vcmask 261120
        %v284 = vsel %vm282, %v265, 0
        %286 = vmatprep.subr.bf16.mxu0 0
        %287 = vmatpush1.bf16.msra.mxu0 %v278
        %288 = vmatprep.subr.bf16.mxu0 0
        %289 = vmatpush1.bf16.msra.mxu0 %v279
        %290 = vmatprep.subr.bf16.mxu0 0
        %291 = vmatpush1.bf16.msra.mxu0 0
        %292 = vmatprep.subr.bf16.mxu0 0
        %293 = vmatpush1.bf16.msra.mxu0 0
        %294 = vmatprep.subr.bf16.mxu0 0
        %295 = vmatpush1.bf16.msra.mxu0 0
        %296 = vmatprep.subr.bf16.mxu0 0
        %297 = vmatpush1.bf16.msra.mxu0 0
        %298 = vmatprep.subr.bf16.mxu0 0
        %299 = vmatpush1.bf16.msra.mxu0 0
        %300 = vmatprep.subr.bf16.mxu0 0
        %301 = vmatpush1.bf16.msra.mxu0 0
        %302 = vmatprep.subr.bf16.mxu0 0
        %303 = vmatpush1.bf16.msra.mxu0 0
        %304 = vmatprep.subr.bf16.mxu0 0
        %305 = vmatpush1.bf16.msra.mxu0 0
        %306 = vmatprep.subr.bf16.mxu0 0
        %307 = vmatpush1.bf16.msra.mxu0 0
        %308 = vmatprep.subr.bf16.mxu0 0
        %309 = vmatpush1.bf16.msra.mxu0 0
        %310 = vmatprep.subr.bf16.mxu0 0
        %311 = vmatpush1.bf16.msra.mxu0 0
        %312 = vmatprep.subr.bf16.mxu0 0
        %313 = vmatpush1.bf16.msra.mxu0 0
        %314 = vmatprep.subr.bf16.mxu0 0
        %315 = vmatpush1.bf16.msra.mxu0 0
        %316 = vmatprep.subr.bf16.mxu0 0
        %317 = vmatpush1.bf16.msra.mxu0 0
        %318 = vmatprep.mubr.bf16.mxu0 0
        %319 = vmatmul.mubr.bf16.gmra.mrb[0].mxu0 %v284
        %v320 = vpop.f32.mrb[0].mxu0
        %v321 = vadd.f32 0.0, %v320
        %v322 = vpop.f32.mrb[0].mxu0
        %v323 = vpop.f32.mrb[0].mxu0
        %v324 = vpop.f32.mrb[0].mxu0
        %325 = vdwg.mxu0
        %v326 = vmax.f32 %v321, 0.0
        %v327 = vld [vmem:[#allocation2] sm:$0xff]
        %v328 = vpack.c.bf16 %v326, %v326
        %v329 = vld [vmem:[%s230] sm:$0xf]
        %v330 = vld [vmem:[%s230 + $0x4] sm:$0xf]
        %v331 = vld [vmem:[%s230 + $0x8] sm:$0xf]
        %v332 = vld [vmem:[%s230 + $0xc] sm:$0xf]
        %v333 = vld [vmem:[%s230 + $0x10] sm:$0xf]
        %v334 = vld [vmem:[%s230 + $0x14] sm:$0xf]
        %v335 = vld [vmem:[%s230 + $0x18] sm:$0xf]
        %v336 = vld [vmem:[%s230 + $0x1c] sm:$0xf]
        %v337 = vld [vmem:[%s230 + $0x20] sm:$0xf]
        %v338 = vld [vmem:[%s230 + $0x24] sm:$0xf]
        %v339 = vld [vmem:[%s230 + $0x28] sm:$0xf]
        %v340 = vld [vmem:[%s230 + $0x2c] sm:$0xf]
        %v341 = vld [vmem:[%s230 + $0x30] sm:$0xf]
        %v342 = vld [vmem:[%s230 + $0x34] sm:$0xf]
        %v343 = vld [vmem:[%s230 + $0x38] sm:$0xf]
        %v344 = vld [vmem:[%s230 + $0x3c] sm:$0xf]
        %v361 = vunpack.c.l.b16 %v329
        %v362 = vunpack.c.l.b16 %v330
        %v363 = vunpack.c.l.b16 %v331
        %v364 = vunpack.c.l.b16 %v332
        %v365 = vunpack.c.l.b16 %v333
        %v366 = vunpack.c.l.b16 %v334
        %v367 = vunpack.c.l.b16 %v335
        %v368 = vunpack.c.l.b16 %v336
        %v369 = vunpack.c.l.b16 %v337
        %v370 = vunpack.c.l.b16 %v338
        %v371 = vunpack.c.l.b16 %v339
        %v372 = vunpack.c.l.b16 %v340
        %v373 = vunpack.c.l.b16 %v341
        %v374 = vunpack.c.l.b16 %v342
        %v375 = vunpack.c.l.b16 %v343
        %v376 = vunpack.c.l.b16 %v344
        %v377 = vpack.c.b16 %v362, %v361
        %v378 = vpack.c.b16 %v364, %v363
        %v379 = vpack.c.b16 %v366, %v365
        %v380 = vpack.c.b16 %v368, %v367
        %v381 = vpack.c.b16 %v370, %v369
        %v382 = vpack.c.b16 %v372, %v371
        %v383 = vpack.c.b16 %v374, %v373
        %v384 = vpack.c.b16 %v376, %v375
        %393 = vmatprep.subr.bf16.mxu0 0
        %394 = vmatpush1.bf16.msra.mxu0 %v377
        %395 = vmatprep.subr.bf16.mxu0 0
        %396 = vmatpush1.bf16.msra.mxu0 %v378
        %397 = vmatprep.subr.bf16.mxu0 0
        %398 = vmatpush1.bf16.msra.mxu0 %v379
        %399 = vmatprep.subr.bf16.mxu0 0
        %400 = vmatpush1.bf16.msra.mxu0 %v380
        %401 = vmatprep.subr.bf16.mxu0 0
        %402 = vmatpush1.bf16.msra.mxu0 %v381
        %403 = vmatprep.subr.bf16.mxu0 0
        %404 = vmatpush1.bf16.msra.mxu0 %v382
        %405 = vmatprep.subr.bf16.mxu0 0
        %406 = vmatpush1.bf16.msra.mxu0 %v383
        %407 = vmatprep.subr.bf16.mxu0 0
        %408 = vmatpush1.bf16.msra.mxu0 %v384
        %409 = vmatprep.subr.bf16.mxu0 0
        %410 = vmatpush1.bf16.msra.mxu0 0
        %411 = vmatprep.subr.bf16.mxu0 0
        %412 = vmatpush1.bf16.msra.mxu0 0
        %413 = vmatprep.subr.bf16.mxu0 0
        %414 = vmatpush1.bf16.msra.mxu0 0
        %415 = vmatprep.subr.bf16.mxu0 0
        %416 = vmatpush1.bf16.msra.mxu0 0
        %417 = vmatprep.subr.bf16.mxu0 0
        %418 = vmatpush1.bf16.msra.mxu0 0
        %419 = vmatprep.subr.bf16.mxu0 0
        %420 = vmatpush1.bf16.msra.mxu0 0
        %421 = vmatprep.subr.bf16.mxu0 0
        %422 = vmatpush1.bf16.msra.mxu0 0
        %423 = vmatprep.subr.bf16.mxu0 0
        %424 = vmatpush1.bf16.msra.mxu0 0
        %425 = vmatprep.mubr.bf16.mxu0 0
        %426 = vmatmul.mubr.bf16.gmra.mrb[0].mxu0 %v328
        %v427 = vpop.f32.mrb[0].mxu0
        %v428 = vadd.f32 0.0, %v427
        %v429 = vpop.f32.mrb[0].mxu0
        %v430 = vpop.f32.mrb[0].mxu0
        %v431 = vpop.f32.mrb[0].mxu0
        %432 = vdwg.mxu0
        %v433 = vadd.f32 %v327, %v428
        %434 = vst [vmem:[#allocation2] sm:$0xff] %v433
        // Predicated region
        $region49: #{tpu_custom_call.1} parent=31 // pred_check
          %p435 = pneg %p260
        $region50: #{tpu_custom_call.1} parent=31 // pred_check_branch
          %437 = sbr.rel (%p435) target = $region52
        $region51: #{tpu_custom_call.1} parent=31 // pred_region
          %v438 = vld [vmem:[#allocation2] sm:$0xff]
          %439 = vst [vmem:[%s257] sm:$0xff] %v438
        $region52: #{tpu_custom_call.1} parent=31 // pred_fallthru
          _
        %s440 = sand.u32 %s118, 1
        %s441 = scalar_lea.sflag [#allocation5], %s440
        %s442 = sand.u32 %s118, 1
        %s443 = smul.addr %s442, 8
        %s444 = scalar_lea.vmem [#allocation9], %s443
        // Predicated region
        $region53: #{tpu_custom_call.1} parent=31 // pred_check
          %p445 = pneg %p128
        $region54: #{tpu_custom_call.1} parent=31 // pred_check_branch
          %447 = sbr.rel (%p445) target = $region56
        $region55: #{tpu_custom_call.1} parent=31 // pred_region
          %s449 = ssub.s32 128, 128
          %450 = vsyncadd %s441, %s449
          %s451 = smul.addr %s25, 128
          %s452 = scalar_lea.hbm %s3, %s451
          %s454 = sshll.u32 %s444, 4
          %s455 = int_to_ptr.vmem [resolvable:$true] %s454
          %457 = dma.vmem_to_hbm [thread:$0]  %s455, 128, %s452, %s441
        $region56: #{tpu_custom_call.1} parent=31 // pred_fallthru
          _
      $region32: #{tpu_custom_call.1} parent=5 // pred_fallthru
        _
      %p458 = scmp.le.s32.totalorder 2, %s16
      // Predicated region
      $region57: #{tpu_custom_call.1} parent=5 // pred_check
        %p459 = pneg %p458
      $region58: #{tpu_custom_call.1} parent=5 // pred_check_branch
        %461 = sbr.rel (%p459) target = $region60
      $region59: #{tpu_custom_call.1} parent=5 // pred_region
        %s462 = ssub.s32 %s16, 2
        // Predicated region
        $region61: #{tpu_custom_call.1} parent=59 // pred_check
          %p463 = pneg %p134
        $region62: #{tpu_custom_call.1} parent=59 // pred_check_branch
          %465 = sbr.rel (%p463) target = $region64
        $region63: #{tpu_custom_call.1} parent=59 // pred_region
          %s466 = sand.u32 %s119, 1
          %s467 = scalar_lea.sflag [#allocation5], %s466
          %s468 = sand.u32 %s119, 1
          %s469 = smul.addr %s468, 8
          %s470 = scalar_lea.vmem [#allocation9], %s469
          %471 = dma.done %s467, 128
        $region64: #{tpu_custom_call.1} parent=59 // pred_fallthru
          _
      $region60: #{tpu_custom_call.1} parent=5 // pred_fallthru
        _
    $region6: #{tpu_custom_call.1} parent=1 // loop_footer
      %s20 = sadd.s32 1, %s16
    $region7: #{tpu_custom_call.1} parent=1 // loop_footer_branch
      %15 = sbr.rel target = $region3
    $region8: #{tpu_custom_call.1} parent=1 // loop_exit
      _
    %472 = vsyncpa [#allocation4], 1
    %s473 = scalar_lea.sflag [#allocation4], 1
    %474 = vsyncpa %s473, 1
    %475 = vsyncpa [#allocation7], 1
    %s476 = scalar_lea.sflag [#allocation7], 1
    %477 = vsyncpa %s476, 1
    %478 = vsyncpa [#allocation5], 1
    %s479 = scalar_lea.sflag [#allocation5], 1
    %480 = vsyncpa %s479, 1

</llo_original>
